<compile_context>
chip_gen: v7x
topology: tpu7x:2x2x1
jax: 0.10.0
libtpu: 0.0.40
codegen_flags: <defaults>
</compile_context>

<pallas_src>
import jax
import jax.numpy as jnp
from jax.experimental import pallas as pl
from jax.experimental.pallas import tpu as pltpu


def _actor_mlp_kernel(x_ref, w1_ref, b1_ref, w2_ref, b2_ref, w3_ref, b3_ref, o_ref):
    x = x_ref[...].astype(jnp.float32)
    h1 = jnp.tanh(
        jnp.dot(x, w1_ref[...].astype(jnp.float32),
                preferred_element_type=jnp.float32)
        + b1_ref[...].astype(jnp.float32)
    )
    h2 = jnp.tanh(
        jnp.dot(h1, w2_ref[...].astype(jnp.float32),
                preferred_element_type=jnp.float32)
        + b2_ref[...].astype(jnp.float32)
    )
    out = (
        jnp.dot(h2, w3_ref[...].astype(jnp.float32),
                preferred_element_type=jnp.float32)
        + b3_ref[...].astype(jnp.float32)
    )
    o_ref[...] = out.astype(o_ref.dtype)


def actor_forward(x, w1, b1, w2, b2, w3, b3, *, block_b: int = 512):
    """Fused Actor MLP forward.

    x : [B, state_dim]; w* are (in, out); b* are (out,).
    Equivalent to torch: tanh(x @ W1 + b1) -> tanh(. @ W2 + b2) -> . @ W3 + b3
    """
    B, S = x.shape
    H1 = w1.shape[1]
    H2 = w2.shape[1]
    A = w3.shape[1]

    # Lane-dense 2-D biases so they broadcast against (tb, out) in-kernel.
    b1_2d = b1.reshape(1, H1)
    b2_2d = b2.reshape(1, H2)
    b3_2d = b3.reshape(1, A)

    # Batch tiling: take the whole batch as one block when it fits (no padding
    # copy at all); otherwise 512-row blocks (sublane-aligned) + tail pad only
    # for ragged large batches.
    tb = B if B <= block_b else block_b
    Bp = pl.cdiv(B, tb) * tb
    if Bp != B:
        x = jnp.pad(x, ((0, Bp - B), (0, 0)))  # padded rows produce junk we slice off

    out = pl.pallas_call(
        _actor_mlp_kernel,
        out_shape=jax.ShapeDtypeStruct((Bp, A), x.dtype),
        grid_spec=pltpu.PrefetchScalarGridSpec(
            num_scalar_prefetch=0,
            grid=(Bp // tb,),
            in_specs=[
                pl.BlockSpec((tb, S), lambda i: (i, 0)),   # X tile (batch-tiled)
                pl.BlockSpec((S, H1), lambda i: (0, 0)),   # W1 (resident)
                pl.BlockSpec((1, H1), lambda i: (0, 0)),   # b1
                pl.BlockSpec((H1, H2), lambda i: (0, 0)),  # W2
                pl.BlockSpec((1, H2), lambda i: (0, 0)),   # b2
                pl.BlockSpec((H2, A), lambda i: (0, 0)),   # W3
                pl.BlockSpec((1, A), lambda i: (0, 0)),    # b3
            ],
            out_specs=pl.BlockSpec((tb, A), lambda i: (i, 0)),
        ),
        compiler_params=pltpu.CompilerParams(
            dimension_semantics=("parallel",),
        ),
    )(x, w1, b1_2d, w2, b2_2d, w3, b3_2d)

    return out[:B] if Bp != B else out


def actor_forward_ref(x, w1, b1, w2, b2, w3, b3):
    xf = x.astype(jnp.float32)
    h1 = jnp.tanh(xf @ w1 + b1)
    h2 = jnp.tanh(h1 @ w2 + b2)
    return (h2 @ w3 + b3).astype(x.dtype)


# TODO(synk): training utilities (Adam step, PPO clipped policy_loss backward)
#             and MultivariateNormal sampling in inference() are host-side /
#             autograd logic, not part of forward(); not translated to Pallas.

if __name__ == "__main__":
    key = jax.random.PRNGKey(0)
    state_dim, n_actions, batch = 8, 4, 2
    ks = jax.random.split(key, 7)

    x = jax.random.normal(ks[0], (batch, state_dim), dtype=jnp.float32)
    w1 = jax.random.normal(ks[1], (state_dim, 64), dtype=jnp.float32) * 0.1
    b1 = jax.random.normal(ks[2], (64,), dtype=jnp.float32) * 0.1
    w2 = jax.random.normal(ks[3], (64, 32), dtype=jnp.float32) * 0.1
    b2 = jax.random.normal(ks[4], (32,), dtype=jnp.float32) * 0.1
    w3 = jax.random.normal(ks[5], (32, n_actions), dtype=jnp.float32) * 0.1
    b3 = jax.random.normal(ks[6], (n_actions,), dtype=jnp.float32) * 0.1

    y = actor_forward(x, w1, b1, w2, b2, w3, b3)
    jax.block_until_ready(y)

    y_ref = actor_forward_ref(x, w1, b1, w2, b2, w3, b3)
    assert y.shape == (batch, n_actions) and y.dtype == x.dtype
    assert jnp.allclose(y, y_ref, atol=1e-4, rtol=1e-4)
    print("KERNEL_OK")
</pallas_src>

<mosaic_0001>
module attributes {stable_mosaic.version = 11 : i64} {
  func.func @_actor_mlp_kernel(%arg0: i32, %arg1: memref<2x8xf32, #tpu.memory_space<vmem>>, %arg2: memref<8x64xf32, #tpu.memory_space<vmem>>, %arg3: memref<1x64xf32, #tpu.memory_space<vmem>>, %arg4: memref<64x32xf32, #tpu.memory_space<vmem>>, %arg5: memref<1x32xf32, #tpu.memory_space<vmem>>, %arg6: memref<32x4xf32, #tpu.memory_space<vmem>>, %arg7: memref<1x4xf32, #tpu.memory_space<vmem>>, %arg8: memref<2x4xf32, #tpu.memory_space<vmem>>) attributes {dimension_semantics = [#tpu.dimension_semantics<parallel>], iteration_bounds = array<i64: 1>, scalar_prefetch = 0 : i64, scratch_operands = 0 : i64, tpu.core_type = #tpu.core_type<tc>, window_params = [{transform_indices = @transform_0, window_bounds = array<i64: 2, 8>}, {pipeline_mode = #tpu.pipeline_mode<synchronous>, transform_indices = @transform_1, window_bounds = array<i64: 8, 64>}, {pipeline_mode = #tpu.pipeline_mode<synchronous>, transform_indices = @transform_2, window_bounds = array<i64: 1, 64>}, {pipeline_mode = #tpu.pipeline_mode<synchronous>, transform_indices = @transform_3, window_bounds = array<i64: 64, 32>}, {pipeline_mode = #tpu.pipeline_mode<synchronous>, transform_indices = @transform_4, window_bounds = array<i64: 1, 32>}, {pipeline_mode = #tpu.pipeline_mode<synchronous>, transform_indices = @transform_5, window_bounds = array<i64: 32, 4>}, {pipeline_mode = #tpu.pipeline_mode<synchronous>, transform_indices = @transform_6, window_bounds = array<i64: 1, 4>}, {transform_indices = @transform_7, window_bounds = array<i64: 2, 4>}]} {
    %c0 = arith.constant 0 : index
    %c0_0 = arith.constant 0 : index
    %0 = vector.load %arg1[%c0, %c0_0] : memref<2x8xf32, #tpu.memory_space<vmem>>, vector<2x8xf32>
    %c0_1 = arith.constant 0 : index
    %c0_2 = arith.constant 0 : index
    %1 = vector.load %arg2[%c0_1, %c0_2] : memref<8x64xf32, #tpu.memory_space<vmem>>, vector<8x64xf32>
    %cst = arith.constant dense<0.000000e+00> : vector<2x64xf32>
    %2 = tpu.matmul %0, %1, %cst {dimension_numbers = #tpu.dot_dimension_numbers<[1], [0], [0], [1], [0, 0, 1, 1], [], []>} : vector<2x8xf32>, vector<8x64xf32>, vector<2x64xf32> -> vector<2x64xf32>
    %c0_3 = arith.constant 0 : index
    %c0_4 = arith.constant 0 : index
    %3 = vector.load %arg3[%c0_3, %c0_4] : memref<1x64xf32, #tpu.memory_space<vmem>>, vector<1x64xf32>
    %4 = vector.broadcast %3 : vector<1x64xf32> to vector<2x64xf32>
    %5 = arith.addf %2, %4 : vector<2x64xf32>
    %6 = math.tanh %5 : vector<2x64xf32>
    %c0_5 = arith.constant 0 : index
    %c0_6 = arith.constant 0 : index
    %7 = vector.load %arg4[%c0_5, %c0_6] : memref<64x32xf32, #tpu.memory_space<vmem>>, vector<64x32xf32>
    %cst_7 = arith.constant dense<0.000000e+00> : vector<2x32xf32>
    %8 = tpu.matmul %6, %7, %cst_7 {dimension_numbers = #tpu.dot_dimension_numbers<[1], [0], [0], [1], [0, 0, 1, 1], [], []>} : vector<2x64xf32>, vector<64x32xf32>, vector<2x32xf32> -> vector<2x32xf32>
    %c0_8 = arith.constant 0 : index
    %c0_9 = arith.constant 0 : index
    %9 = vector.load %arg5[%c0_8, %c0_9] : memref<1x32xf32, #tpu.memory_space<vmem>>, vector<1x32xf32>
    %10 = vector.broadcast %9 : vector<1x32xf32> to vector<2x32xf32>
    %11 = arith.addf %8, %10 : vector<2x32xf32>
    %12 = math.tanh %11 : vector<2x32xf32>
    %c0_10 = arith.constant 0 : index
    %c0_11 = arith.constant 0 : index
    %13 = vector.load %arg6[%c0_10, %c0_11] : memref<32x4xf32, #tpu.memory_space<vmem>>, vector<32x4xf32>
    %cst_12 = arith.constant dense<0.000000e+00> : vector<2x4xf32>
    %14 = tpu.matmul %12, %13, %cst_12 {dimension_numbers = #tpu.dot_dimension_numbers<[1], [0], [0], [1], [0, 0, 1, 1], [], []>} : vector<2x32xf32>, vector<32x4xf32>, vector<2x4xf32> -> vector<2x4xf32>
    %c0_13 = arith.constant 0 : index
    %c0_14 = arith.constant 0 : index
    %15 = vector.load %arg7[%c0_13, %c0_14] : memref<1x4xf32, #tpu.memory_space<vmem>>, vector<1x4xf32>
    %16 = vector.broadcast %15 : vector<1x4xf32> to vector<2x4xf32>
    %17 = arith.addf %14, %16 : vector<2x4xf32>
    %c0_15 = arith.constant 0 : index
    %c0_16 = arith.constant 0 : index
    %18 = vector.load %arg8[%c0_15, %c0_16] : memref<2x4xf32, #tpu.memory_space<vmem>>, vector<2x4xf32>
    tpu.vector_store %arg8[%c0_15, %c0_16], %17 {strides = array<i32>} : memref<2x4xf32, #tpu.memory_space<vmem>>, vector<2x4xf32>,
    return
  }
  func.func @transform_0(%arg0: i32) -> (i32, i32) {
    %c0_i32 = arith.constant 0 : i32
    %c0_i32_0 = arith.constant 0 : i32
    return %arg0, %c0_i32 : i32, i32
  }
  func.func @transform_1(%arg0: i32) -> (i32, i32) {
    %c0_i32 = arith.constant 0 : i32
    %c0_i32_0 = arith.constant 0 : i32
    %c0_i32_1 = arith.constant 0 : i32
    return %c0_i32, %c0_i32_0 : i32, i32
  }
  func.func @transform_2(%arg0: i32) -> (i32, i32) {
    %c0_i32 = arith.constant 0 : i32
    %c0_i32_0 = arith.constant 0 : i32
    %c0_i32_1 = arith.constant 0 : i32
    return %c0_i32, %c0_i32_0 : i32, i32
  }
  func.func @transform_3(%arg0: i32) -> (i32, i32) {
    %c0_i32 = arith.constant 0 : i32
    %c0_i32_0 = arith.constant 0 : i32
    %c0_i32_1 = arith.constant 0 : i32
    return %c0_i32, %c0_i32_0 : i32, i32
  }
  func.func @transform_4(%arg0: i32) -> (i32, i32) {
    %c0_i32 = arith.constant 0 : i32
    %c0_i32_0 = arith.constant 0 : i32
    %c0_i32_1 = arith.constant 0 : i32
    return %c0_i32, %c0_i32_0 : i32, i32
  }
  func.func @transform_5(%arg0: i32) -> (i32, i32) {
    %c0_i32 = arith.constant 0 : i32
    %c0_i32_0 = arith.constant 0 : i32
    %c0_i32_1 = arith.constant 0 : i32
    return %c0_i32, %c0_i32_0 : i32, i32
  }
  func.func @transform_6(%arg0: i32) -> (i32, i32) {
    %c0_i32 = arith.constant 0 : i32
    %c0_i32_0 = arith.constant 0 : i32
    %c0_i32_1 = arith.constant 0 : i32
    return %c0_i32, %c0_i32_0 : i32, i32
  }
  func.func @transform_7(%arg0: i32) -> (i32, i32) {
    %c0_i32 = arith.constant 0 : i32
    %c0_i32_0 = arith.constant 0 : i32
    return %arg0, %c0_i32 : i32, i32
  }
}

</mosaic_0001>

<llo_original>
// kernel: tpu_custom_call.1
$region0: #{tpu_custom_call.1}
  #allocation0 [shape = 'u32[]', space=smem, size = 0x4, offset = 0x4, fixed_abs, tag = 'smem constant byte address 0x4 - core index']
  #allocation1 [shape = 'u32[144,128]{1,0:T(1,128)}', space=vmem, size = 0x12000, scoped, tag = 'internal scratch']
  %s0 = inlined_call_operand.vmem [shape: f32[2,8], index: 0, kind: input, shape index: {}]
  %s1 = inlined_call_operand.vmem [shape: f32[8,64], index: 1, kind: input, shape index: {}]
  %s2 = inlined_call_operand.vmem [shape: f32[1,64], index: 2, kind: input, shape index: {}]
  %s3 = inlined_call_operand.vmem [shape: f32[64,32], index: 3, kind: input, shape index: {}]
  %s4 = inlined_call_operand.vmem [shape: f32[1,32], index: 4, kind: input, shape index: {}]
  %s5 = inlined_call_operand.vmem [shape: f32[32,4], index: 5, kind: input, shape index: {}]
  %s6 = inlined_call_operand.vmem [shape: f32[1,4], index: 6, kind: input, shape index: {}]
  %s7 = inlined_call_operand.hbm [shape: f32[2,4], index: 7, kind: output, shape index: {}]
  %s8 = sld [smem:[#allocation0]]
  $region38: #{tpu_custom_call.1} parent=0
    _
  %s10 = ssub.s32 1, %s8
  %s11 = scalar_select 0, %s10, %s8
  $region1: #{tpu_custom_call.1} parent=0
    #allocation2 [shape = 'u8[1024]{0}', space=vmem, size = 0x400, scoped, tag = 'output window, operand 0, single buffered']
    #allocation3 [shape = 's32[1]{0}', space=sflag, size = 0x4, scoped, tag = 'scoped memory for tpu_custom_call.1']
    %12 = vsyncpa [#allocation3], 0
    // Predicated region
    $region2: #{tpu_custom_call.1} parent=1 // pred_check
      _
    $region3: #{tpu_custom_call.1} parent=1 // pred_check_branch
      %14 = sbr.rel (0) target = $region5
    $region4: #{tpu_custom_call.1} parent=1 // pred_region
      _
    $region5: #{tpu_custom_call.1} parent=1 // pred_fallthru
      _
    // Predicated region
    $region6: #{tpu_custom_call.1} parent=1 // pred_check
      _
    $region7: #{tpu_custom_call.1} parent=1 // pred_check_branch
      %16 = sbr.rel (0) target = $region9
    $region8: #{tpu_custom_call.1} parent=1 // pred_region
      _
    $region9: #{tpu_custom_call.1} parent=1 // pred_fallthru
      _
    // Predicated region
    $region10: #{tpu_custom_call.1} parent=1 // pred_check
      _
    $region11: #{tpu_custom_call.1} parent=1 // pred_check_branch
      %18 = sbr.rel (0) target = $region13
    $region12: #{tpu_custom_call.1} parent=1 // pred_region
      _
    $region13: #{tpu_custom_call.1} parent=1 // pred_fallthru
      _
    // Predicated region
    $region14: #{tpu_custom_call.1} parent=1 // pred_check
      _
    $region15: #{tpu_custom_call.1} parent=1 // pred_check_branch
      %20 = sbr.rel (0) target = $region17
    $region16: #{tpu_custom_call.1} parent=1 // pred_region
      _
    $region17: #{tpu_custom_call.1} parent=1 // pred_fallthru
      _
    // Predicated region
    $region18: #{tpu_custom_call.1} parent=1 // pred_check
      _
    $region19: #{tpu_custom_call.1} parent=1 // pred_check_branch
      %22 = sbr.rel (0) target = $region21
    $region20: #{tpu_custom_call.1} parent=1 // pred_region
      _
    $region21: #{tpu_custom_call.1} parent=1 // pred_fallthru
      _
    // Predicated region
    $region22: #{tpu_custom_call.1} parent=1 // pred_check
      _
    $region23: #{tpu_custom_call.1} parent=1 // pred_check_branch
      %24 = sbr.rel (0) target = $region25
    $region24: #{tpu_custom_call.1} parent=1 // pred_region
      _
    $region25: #{tpu_custom_call.1} parent=1 // pred_fallthru
      _
    // Predicated region
    $region26: #{tpu_custom_call.1} parent=1 // pred_check
      _
    $region27: #{tpu_custom_call.1} parent=1 // pred_check_branch
      %26 = sbr.rel (0) target = $region29
    $region28: #{tpu_custom_call.1} parent=1 // pred_region
      _
    $region29: #{tpu_custom_call.1} parent=1 // pred_fallthru
      _
    %v27 = vld [vmem:[%s0] sm:$0x3]
    %v28 = vld [vmem:[%s1] sm:$0xff]
    %v29 = vld [vmem:[%s2] sm:$0x1]
    %v31 = vlaneseq
    %v32 = vshrl.u32 %v31, 7
    %v33 = vsub.s32 0, %v32
    %v34 = vrot.slane %v29, %v33
    %vm36 = vcmask 64512
    %v38 = vsel %vm36, %v27, 0
    %40 = vmatprep.subr.mxu0 0.0
    %41 = vmatpush1.msra.mxu0 %v28
    %42 = vmatprep.subr.mxu0 0.0
    %43 = vmatpush1.msra.mxu0 0.0
    %44 = vmatprep.subr.mxu0 0.0
    %45 = vmatpush1.msra.mxu0 0.0
    %46 = vmatprep.subr.mxu0 0.0
    %47 = vmatpush1.msra.mxu0 0.0
    %48 = vmatprep.subr.mxu0 0.0
    %49 = vmatpush1.msra.mxu0 0.0
    %50 = vmatprep.subr.mxu0 0.0
    %51 = vmatpush1.msra.mxu0 0.0
    %52 = vmatprep.subr.mxu0 0.0
    %53 = vmatpush1.msra.mxu0 0.0
    %54 = vmatprep.subr.mxu0 0.0
    %55 = vmatpush1.msra.mxu0 0.0
    %56 = vmatprep.subr.mxu0 0.0
    %57 = vmatpush1.msra.mxu0 0.0
    %58 = vmatprep.subr.mxu0 0.0
    %59 = vmatpush1.msra.mxu0 0.0
    %60 = vmatprep.subr.mxu0 0.0
    %61 = vmatpush1.msra.mxu0 0.0
    %62 = vmatprep.subr.mxu0 0.0
    %63 = vmatpush1.msra.mxu0 0.0
    %64 = vmatprep.subr.mxu0 0.0
    %65 = vmatpush1.msra.mxu0 0.0
    %66 = vmatprep.subr.mxu0 0.0
    %67 = vmatpush1.msra.mxu0 0.0
    %68 = vmatprep.subr.mxu0 0.0
    %69 = vmatpush1.msra.mxu0 0.0
    %70 = vmatprep.subr.mxu0 0.0
    %71 = vmatpush1.msra.mxu0 0.0
    %72 = vmatprep.subr.mxu0 0.0
    %73 = vmatpush1.msra.mxu0 0.0
    %74 = vmatprep.subr.mxu0 0.0
    %75 = vmatpush1.msra.mxu0 0.0
    %76 = vmatprep.subr.mxu0 0.0
    %77 = vmatpush1.msra.mxu0 0.0
    %78 = vmatprep.subr.mxu0 0.0
    %79 = vmatpush1.msra.mxu0 0.0
    %80 = vmatprep.subr.mxu0 0.0
    %81 = vmatpush1.msra.mxu0 0.0
    %82 = vmatprep.subr.mxu0 0.0
    %83 = vmatpush1.msra.mxu0 0.0
    %84 = vmatprep.subr.mxu0 0.0
    %85 = vmatpush1.msra.mxu0 0.0
    %86 = vmatprep.subr.mxu0 0.0
    %87 = vmatpush1.msra.mxu0 0.0
    %88 = vmatprep.subr.mxu0 0.0
    %89 = vmatpush1.msra.mxu0 0.0
    %90 = vmatprep.subr.mxu0 0.0
    %91 = vmatpush1.msra.mxu0 0.0
    %92 = vmatprep.subr.mxu0 0.0
    %93 = vmatpush1.msra.mxu0 0.0
    %94 = vmatprep.subr.mxu0 0.0
    %95 = vmatpush1.msra.mxu0 0.0
    %96 = vmatprep.subr.mxu0 0.0
    %97 = vmatpush1.msra.mxu0 0.0
    %98 = vmatprep.subr.mxu0 0.0
    %99 = vmatpush1.msra.mxu0 0.0
    %100 = vmatprep.subr.mxu0 0.0
    %101 = vmatpush1.msra.mxu0 0.0
    %102 = vmatprep.subr.mxu0 0.0
    %103 = vmatpush1.msra.mxu0 0.0
    %104 = vmatprep.mubr.f32.mxu0 0.0
    %105 = vmatmul.mubr.f32.gmra.mrb[0].mxu0 %v38
    %v106 = vpop.f32.mrb[0].mxu0
    %v107 = vadd.f32 %v34, %v106
    %v108 = vpop.f32.mrb[0].mxu0
    %109 = vdwg.mxu0
    %v110 = vtanh.pop %v107
    %v111 = vld [vmem:[%s3] sm:$0xff]
    %v112 = vld [vmem:[%s3 + $0x8] sm:$0xff]
    %v113 = vld [vmem:[%s3 + $0x10] sm:$0xff]
    %v114 = vld [vmem:[%s3 + $0x18] sm:$0xff]
    %v115 = vld [vmem:[%s3 + $0x20] sm:$0xff]
    %v116 = vld [vmem:[%s3 + $0x28] sm:$0xff]
    %v117 = vld [vmem:[%s3 + $0x30] sm:$0xff]
    %v118 = vld [vmem:[%s3 + $0x38] sm:$0xff]
    %v119 = vld [vmem:[%s4] sm:$0x1]
    %v121 = vlaneseq
    %v122 = vshrl.u32 %v121, 7
    %v123 = vsub.s32 0, %v122
    %v124 = vrot.slane %v119, %v123
    %vm126 = vcmask 523264
    %v128 = vsel %vm126, %v110, 0
    %130 = vmatprep.subr.mxu0 0.0
    %131 = vmatpush1.msra.mxu0 %v111
    %132 = vmatprep.subr.mxu0 0.0
    %133 = vmatpush1.msra.mxu0 %v112
    %134 = vmatprep.subr.mxu0 0.0
    %135 = vmatpush1.msra.mxu0 %v113
    %136 = vmatprep.subr.mxu0 0.0
    %137 = vmatpush1.msra.mxu0 %v114
    %138 = vmatprep.subr.mxu0 0.0
    %139 = vmatpush1.msra.mxu0 %v115
    %140 = vmatprep.subr.mxu0 0.0
    %141 = vmatpush1.msra.mxu0 %v116
    %142 = vmatprep.subr.mxu0 0.0
    %143 = vmatpush1.msra.mxu0 %v117
    %144 = vmatprep.subr.mxu0 0.0
    %145 = vmatpush1.msra.mxu0 %v118
    %146 = vmatprep.subr.mxu0 0.0
    %147 = vmatpush1.msra.mxu0 0.0
    %148 = vmatprep.subr.mxu0 0.0
    %149 = vmatpush1.msra.mxu0 0.0
    %150 = vmatprep.subr.mxu0 0.0
    %151 = vmatpush1.msra.mxu0 0.0
    %152 = vmatprep.subr.mxu0 0.0
    %153 = vmatpush1.msra.mxu0 0.0
    %154 = vmatprep.subr.mxu0 0.0
    %155 = vmatpush1.msra.mxu0 0.0
    %156 = vmatprep.subr.mxu0 0.0
    %157 = vmatpush1.msra.mxu0 0.0
    %158 = vmatprep.subr.mxu0 0.0
    %159 = vmatpush1.msra.mxu0 0.0
    %160 = vmatprep.subr.mxu0 0.0
    %161 = vmatpush1.msra.mxu0 0.0
    %162 = vmatprep.subr.mxu0 0.0
    %163 = vmatpush1.msra.mxu0 0.0
    %164 = vmatprep.subr.mxu0 0.0
    %165 = vmatpush1.msra.mxu0 0.0
    %166 = vmatprep.subr.mxu0 0.0
    %167 = vmatpush1.msra.mxu0 0.0
    %168 = vmatprep.subr.mxu0 0.0
    %169 = vmatpush1.msra.mxu0 0.0
    %170 = vmatprep.subr.mxu0 0.0
    %171 = vmatpush1.msra.mxu0 0.0
    %172 = vmatprep.subr.mxu0 0.0
    %173 = vmatpush1.msra.mxu0 0.0
    %174 = vmatprep.subr.mxu0 0.0
    %175 = vmatpush1.msra.mxu0 0.0
    %176 = vmatprep.subr.mxu0 0.0
    %177 = vmatpush1.msra.mxu0 0.0
    %178 = vmatprep.subr.mxu0 0.0
    %179 = vmatpush1.msra.mxu0 0.0
    %180 = vmatprep.subr.mxu0 0.0
    %181 = vmatpush1.msra.mxu0 0.0
    %182 = vmatprep.subr.mxu0 0.0
    %183 = vmatpush1.msra.mxu0 0.0
    %184 = vmatprep.subr.mxu0 0.0
    %185 = vmatpush1.msra.mxu0 0.0
    %186 = vmatprep.subr.mxu0 0.0
    %187 = vmatpush1.msra.mxu0 0.0
    %188 = vmatprep.subr.mxu0 0.0
    %189 = vmatpush1.msra.mxu0 0.0
    %190 = vmatprep.subr.mxu0 0.0
    %191 = vmatpush1.msra.mxu0 0.0
    %192 = vmatprep.subr.mxu0 0.0
    %193 = vmatpush1.msra.mxu0 0.0
    %194 = vmatprep.mubr.f32.mxu0 0.0
    %195 = vmatmul.mubr.f32.gmra.mrb[0].mxu0 %v128
    %v196 = vpop.f32.mrb[0].mxu0
    %v197 = vadd.f32 %v124, %v196
    %v198 = vpop.f32.mrb[0].mxu0
    %199 = vdwg.mxu0
    %v200 = vtanh.pop %v197
    %v201 = vld [vmem:[%s5] sm:$0xff]
    %v202 = vld [vmem:[%s5 + $0x8] sm:$0xff]
    %v203 = vld [vmem:[%s5 + $0x10] sm:$0xff]
    %v204 = vld [vmem:[%s5 + $0x18] sm:$0xff]
    %v205 = vld [vmem:[%s6] sm:$0x1]
    %v207 = vlaneseq
    %v208 = vshrl.u32 %v207, 7
    %v209 = vsub.s32 0, %v208
    %v210 = vrot.slane %v205, %v209
    %vm212 = vcmask 261120
    %v214 = vsel %vm212, %v200, 0
    %216 = vmatprep.subr.mxu0 0.0
    %217 = vmatpush1.msra.mxu0 %v201
    %218 = vmatprep.subr.mxu0 0.0
    %219 = vmatpush1.msra.mxu0 %v202
    %220 = vmatprep.subr.mxu0 0.0
    %221 = vmatpush1.msra.mxu0 %v203
    %222 = vmatprep.subr.mxu0 0.0
    %223 = vmatpush1.msra.mxu0 %v204
    %224 = vmatprep.subr.mxu0 0.0
    %225 = vmatpush1.msra.mxu0 0.0
    %226 = vmatprep.subr.mxu0 0.0
    %227 = vmatpush1.msra.mxu0 0.0
    %228 = vmatprep.subr.mxu0 0.0
    %229 = vmatpush1.msra.mxu0 0.0
    %230 = vmatprep.subr.mxu0 0.0
    %231 = vmatpush1.msra.mxu0 0.0
    %232 = vmatprep.subr.mxu0 0.0
    %233 = vmatpush1.msra.mxu0 0.0
    %234 = vmatprep.subr.mxu0 0.0
    %235 = vmatpush1.msra.mxu0 0.0
    %236 = vmatprep.subr.mxu0 0.0
    %237 = vmatpush1.msra.mxu0 0.0
    %238 = vmatprep.subr.mxu0 0.0
    %239 = vmatpush1.msra.mxu0 0.0
    %240 = vmatprep.subr.mxu0 0.0
    %241 = vmatpush1.msra.mxu0 0.0
    %242 = vmatprep.subr.mxu0 0.0
    %243 = vmatpush1.msra.mxu0 0.0
    %244 = vmatprep.subr.mxu0 0.0
    %245 = vmatpush1.msra.mxu0 0.0
    %246 = vmatprep.subr.mxu0 0.0
    %247 = vmatpush1.msra.mxu0 0.0
    %248 = vmatprep.subr.mxu0 0.0
    %249 = vmatpush1.msra.mxu0 0.0
    %250 = vmatprep.subr.mxu0 0.0
    %251 = vmatpush1.msra.mxu0 0.0
    %252 = vmatprep.subr.mxu0 0.0
    %253 = vmatpush1.msra.mxu0 0.0
    %254 = vmatprep.subr.mxu0 0.0
    %255 = vmatpush1.msra.mxu0 0.0
    %256 = vmatprep.subr.mxu0 0.0
    %257 = vmatpush1.msra.mxu0 0.0
    %258 = vmatprep.subr.mxu0 0.0
    %259 = vmatpush1.msra.mxu0 0.0
    %260 = vmatprep.subr.mxu0 0.0
    %261 = vmatpush1.msra.mxu0 0.0
    %262 = vmatprep.subr.mxu0 0.0
    %263 = vmatpush1.msra.mxu0 0.0
    %264 = vmatprep.subr.mxu0 0.0
    %265 = vmatpush1.msra.mxu0 0.0
    %266 = vmatprep.subr.mxu0 0.0
    %267 = vmatpush1.msra.mxu0 0.0
    %268 = vmatprep.subr.mxu0 0.0
    %269 = vmatpush1.msra.mxu0 0.0
    %270 = vmatprep.subr.mxu0 0.0
    %271 = vmatpush1.msra.mxu0 0.0
    %272 = vmatprep.subr.mxu0 0.0
    %273 = vmatpush1.msra.mxu0 0.0
    %274 = vmatprep.subr.mxu0 0.0
    %275 = vmatpush1.msra.mxu0 0.0
    %276 = vmatprep.subr.mxu0 0.0
    %277 = vmatpush1.msra.mxu0 0.0
    %278 = vmatprep.subr.mxu0 0.0
    %279 = vmatpush1.msra.mxu0 0.0
    %280 = vmatprep.mubr.f32.mxu0 0.0
    %281 = vmatmul.mubr.f32.gmra.mrb[0].mxu0 %v214
    %v282 = vpop.f32.mrb[0].mxu0
    %v283 = vadd.f32 %v210, %v282
    %v284 = vpop.f32.mrb[0].mxu0
    %285 = vdwg.mxu0
    %vm286 = vcmask 25600
    %287 = vst.msk [vmem:[#allocation2] sm:$0x3] %vm286, %v283
    // Predicated region
    $region30: #{tpu_custom_call.1} parent=1 // pred_check
      _
    $region31: #{tpu_custom_call.1} parent=1 // pred_check_branch
      %289 = sbr.rel (0) target = $region33
    $region32: #{tpu_custom_call.1} parent=1 // pred_region
      %s291 = ssub.s32 32, 32
      %292 = vsyncadd [#allocation3], %s291
      %s294 = sshll.u32 [#allocation2], 4
      %s295 = int_to_ptr.vmem [resolvable:$true] %s294
      %297 = dma.vmem_to_hbm [thread:$0]  %s295, 32, %s7, [#allocation3]
    $region33: #{tpu_custom_call.1} parent=1 // pred_fallthru
      _
    // Predicated region
    $region34: #{tpu_custom_call.1} parent=1 // pred_check
      _
    $region35: #{tpu_custom_call.1} parent=1 // pred_check_branch
      %299 = sbr.rel (0) target = $region37
    $region36: #{tpu_custom_call.1} parent=1 // pred_region
      %300 = dma.done [#allocation3], 32
    $region37: #{tpu_custom_call.1} parent=1 // pred_fallthru
      _
    %301 = vsyncpa [#allocation3], 1

</llo_original>
